<compile_context>
chip_gen: v5e
topology: v5e:2x2
jax: 0.10.0
libtpu: 0.0.40
codegen_flags: <defaults>
</compile_context>

<pallas_src>
import math
import functools

import jax
import jax.numpy as jnp
from jax.experimental import pallas as pl
from jax.experimental.pallas import tpu as pltpu


# ----------------------------------------------------------------------------
# Kernels
# ----------------------------------------------------------------------------
def _fs_kernel_eval(b_ref, x_ref, w1_ref, b1_ref, w2_ref, b2_ref, out_ref, *,
                    native_dtype_tail):
    # Hyper-network: Linear -> ReLU.  MXU runs in the operands' dtype (bf16 by
    # default) with f32 accumulation.
    h = jnp.dot(b_ref[...], w1_ref[...], preferred_element_type=jnp.float32)
    h = jnp.maximum(h + b1_ref[...], 0.0)
    # Linear -> Sigmoid => mu.  Eval: z == mu, and clamp(sigmoid(.),0,1) is a
    # mathematical no-op, so the noise/sigma path is dropped at trace time.
    logits = jnp.dot(h.astype(w2_ref.dtype), w2_ref[...],
                     preferred_element_type=jnp.float32) + b2_ref[...]
    gate = jax.nn.sigmoid(logits)
    if native_dtype_tail:
        out_ref[...] = x_ref[...] * gate.astype(out_ref.dtype)
    else:
        out_ref[...] = (x_ref[...].astype(jnp.float32) * gate).astype(out_ref.dtype)


def _fs_kernel_train(b_ref, x_ref, w1_ref, b1_ref, w2_ref, b2_ref, sn_ref,
                     out_ref, *, native_dtype_tail):
    h = jnp.dot(b_ref[...], w1_ref[...], preferred_element_type=jnp.float32)
    h = jnp.maximum(h + b1_ref[...], 0.0)
    mu = jax.nn.sigmoid(
        jnp.dot(h.astype(w2_ref.dtype), w2_ref[...],
                preferred_element_type=jnp.float32) + b2_ref[...])
    # z = mu + sigma*noise   (sigma*noise pre-folded on host, shape (1, d_out))
    gate = jnp.clip(mu + sn_ref[...], 0.0, 1.0)      # hard_sigmoid
    if native_dtype_tail:
        out_ref[...] = x_ref[...] * gate.astype(out_ref.dtype)
    else:
        out_ref[...] = (x_ref[...].astype(jnp.float32) * gate).astype(out_ref.dtype)


# ----------------------------------------------------------------------------
# Device / tiling / compiler-parameter helpers
# ----------------------------------------------------------------------------
def _device_kind():
    try:
        return jax.devices()[0].device_kind.lower()
    except Exception:
        return ""


def _is_multi_tensorcore(kind):
    # v7x (2 TCs/chip) and v4/v5p megacore benefit from >=2 parallel grid steps;
    # v5e/v6e have a single TensorCore per device.
    return any(tag in kind for tag in ("v7", "v5p", "v4"))


def _is_v5e(kind):
    return ("v5e" in kind) or ("v5 lite" in kind) or ("v5lite" in kind)


def _vmem_capacity_bytes():
    try:
        return int(pltpu.get_tpu_info().vmem_capacity_bytes)
    except Exception:
        return 64 << 20        # conservative fallback: v7x physical VMEM per TC


def _pick_tile_b(batch, *, max_tile=4096, multi_tc=False):
    """Largest multiple-of-8 batch tile <= max_tile.  On multi-TensorCore parts
    the tile is shrunk so the (parallel) grid has >= 2 steps to feed both TCs;
    single-TC chips keep one big step and avoid per-step pipeline overhead."""
    if batch <= 8:
        return batch                          # full-dim block: no (8,) constraint
    tile = max(8, min(max_tile, (batch // 8) * 8))
    if multi_tc and pl.cdiv(batch, tile) < 2:
        tile = max(8, ((pl.cdiv(batch, 2) + 7) // 8) * 8)
    return tile


def _compiler_params(tile_b, d_in, hidden_p, d_out_p,
                     b_itemsize, x_itemsize, w_itemsize):
    # Double-buffered I/O tiles (B, prev_x, out) + weight/bias blocks + slack.
    io_tiles = 2 * tile_b * (d_in * b_itemsize + 2 * d_out_p * x_itemsize)
    weights = 2 * ((d_in * hidden_p + hidden_p * d_out_p) * w_itemsize
                   + (hidden_p + 2 * d_out_p) * 4)
    est = io_tiles + weights + (2 << 20)
    vmem_limit = None
    if est > (16 << 20):                      # above v5e default scoped VMEM only
        cap = (_vmem_capacity_bytes() * 5) // 8   # ~40 MiB v7x, ~80 MiB v5e/v6e
        vmem_limit = int(min(est, cap))
    return pltpu.CompilerParams(dimension_semantics=("parallel",),
                                vmem_limit_bytes=vmem_limit)


# ----------------------------------------------------------------------------
# Forward wrapper
# ----------------------------------------------------------------------------
def feature_selector_forward(prev_x, B, params, *, training=False, noise=None,
                             tile_b=None, mxu_dtype=jnp.bfloat16):
    """Pallas forward pass of FeatureSelector (non_param_stg=False, one hidden
    layer, train_sigma=False).

    mxu_dtype: dtype fed to the MXU for B/W1/W2 (bf16 default = single-pass MXU
    with f32 accumulation; pass jnp.float32 for bit-parity with f32 references).
    In training mode, pass a freshly drawn ``noise`` vector per call to match
    torch's ``self.noise.normal_()``; defaults to ``params['noise']``.
    """
    w1, b1, w2, b2 = params["w1"], params["b1"], params["w2"], params["b2"]
    batch, d_in = B.shape
    hidden = w1.shape[1]
    d_out = w2.shape[1]
    assert prev_x.shape == (batch, d_out)

    kind = _device_kind()
    multi_tc = _is_multi_tensorcore(kind)
    if tile_b is None:
        tile_b = _pick_tile_b(batch, multi_tc=multi_tc)

    # --- lane-density zero-padding (mathematically a no-op) ------------------
    hidden_p = max(128, ((hidden + 127) // 128) * 128)
    d_out_p = ((d_out + 127) // 128) * 128
    if hidden_p != hidden:
        w1 = jnp.pad(w1, ((0, 0), (0, hidden_p - hidden)))
        b1 = jnp.pad(b1, (0, hidden_p - hidden))
        w2 = jnp.pad(w2, ((0, hidden_p - hidden), (0, 0)))
    if d_out_p != d_out:
        w2 = jnp.pad(w2, ((0, 0), (0, d_out_p - d_out)))
        b2 = jnp.pad(b2, (0, d_out_p - d_out))
        prev_x = jnp.pad(prev_x, ((0, 0), (0, d_out_p - d_out)))

    # --- dtype plumbing -------------------------------------------------------
    mxu_dtype = jnp.dtype(mxu_dtype)
    B_mxu = B.astype(mxu_dtype)
    w1 = w1.astype(mxu_dtype)
    w2 = w2.astype(mxu_dtype)
    b1_2d = b1.reshape(1, hidden_p).astype(jnp.float32)
    b2_2d = b2.reshape(1, d_out_p).astype(jnp.float32)
    # bf16-native elementwise tail on v6e/v7x; v5e's VPU has no bf16 -> promote.
    native_tail = (jnp.dtype(prev_x.dtype) == jnp.dtype(jnp.bfloat16)
                   and not _is_v5e(kind))

    grid = (pl.cdiv(batch, tile_b),)

    common_in_specs = [
        pl.BlockSpec((tile_b, d_in), lambda i: (i, 0)),       # B
        pl.BlockSpec((tile_b, d_out_p), lambda i: (i, 0)),    # prev_x
        # Grid-invariant operands (constant index_map): DMA'd once, revisited.
        pl.BlockSpec((d_in, hidden_p), lambda i: (0, 0)),     # W1
        pl.BlockSpec((1, hidden_p), lambda i: (0, 0)),        # b1
        pl.BlockSpec((hidden_p, d_out_p), lambda i: (0, 0)),  # W2
        pl.BlockSpec((1, d_out_p), lambda i: (0, 0)),         # b2
    ]
    out_spec = pl.BlockSpec((tile_b, d_out_p), lambda i: (i, 0))
    compiler_params = _compiler_params(
        tile_b, d_in, hidden_p, d_out_p,
        jnp.dtype(B_mxu.dtype).itemsize, jnp.dtype(prev_x.dtype).itemsize,
        mxu_dtype.itemsize)

    if training:
        if noise is None:
            noise = params["noise"]
        # Fold sigma * noise into one (1, d_out) vector on host: the kernel then
        # does a single vector add (no SMEM scalar read, no per-element muls).
        sigma_noise = (params["sigma"].reshape(()).astype(jnp.float32)
                       * noise.astype(jnp.float32)).reshape(1, d_out)
        if d_out_p != d_out:
            sigma_noise = jnp.pad(sigma_noise, ((0, 0), (0, d_out_p - d_out)))
        kernel = functools.partial(_fs_kernel_train,
                                   native_dtype_tail=native_tail)
        in_specs = common_in_specs + [pl.BlockSpec((1, d_out_p), lambda i: (0, 0))]
        operands = (B_mxu, prev_x, w1, b1_2d, w2, b2_2d, sigma_noise)
    else:
        kernel = functools.partial(_fs_kernel_eval,
                                   native_dtype_tail=native_tail)
        in_specs = common_in_specs
        operands = (B_mxu, prev_x, w1, b1_2d, w2, b2_2d)

    out = pl.pallas_call(
        kernel,
        out_shape=jax.ShapeDtypeStruct((batch, d_out_p), prev_x.dtype),
        grid_spec=pltpu.PrefetchScalarGridSpec(
            num_scalar_prefetch=0, grid=grid,
            in_specs=in_specs, out_specs=out_spec),
        compiler_params=compiler_params,
    )(*operands)

    if d_out_p != d_out:
        out = out[:, :d_out]
    return out


# ----------------------------------------------------------------------------
# Param init + pure-JAX reference
# ----------------------------------------------------------------------------
def init_params(key, hyper_input_dim, hyper_hidden_dim, hyper_output_dim,
                sigma=0.5):
    """Shapes match FeatureSelector.__init__ (single hidden layer;
    PyTorch-Linear-style uniform bounds)."""
    k1, k2, k3, k4, k5 = jax.random.split(key, 5)
    bound1 = 1.0 / math.sqrt(hyper_input_dim)
    bound2 = 1.0 / math.sqrt(hyper_hidden_dim)
    w1 = jax.random.uniform(k1, (hyper_input_dim, hyper_hidden_dim),
                            jnp.float32, -bound1, bound1)
    b1 = jax.random.uniform(k2, (hyper_hidden_dim,), jnp.float32,
                            -bound1, bound1)
    w2 = jax.random.uniform(k3, (hyper_hidden_dim, hyper_output_dim),
                            jnp.float32, -bound2, bound2)
    b2 = jax.random.uniform(k4, (hyper_output_dim,), jnp.float32,
                            -bound2, bound2)
    noise = jax.random.normal(k5, (hyper_output_dim,), jnp.float32)
    return {
        "w1": w1, "b1": b1, "w2": w2, "b2": b2,
        "noise": noise,
        "sigma": jnp.array([sigma], dtype=jnp.float32),
    }


def _reference_forward(prev_x, B, params, training=False, noise=None):
    if noise is None:
        noise = params["noise"]
    h = jnp.maximum(B @ params["w1"] + params["b1"], 0.0)
    mu = jax.nn.sigmoid(h @ params["w2"] + params["b2"])
    z = mu + params["sigma"][0] * noise[None, :] * (1.0 if training else 0.0)
    gate = jnp.clip(z, 0.0, 1.0)
    return prev_x * gate


# ----------------------------------------------------------------------------
# Demo / self-check
# ----------------------------------------------------------------------------
if __name__ == "__main__":
    hyper_input_dim = 32
    hyper_hidden_dim = 64       # hyper_hidden_dim = [64] in the PyTorch module
    hyper_output_dim = 128

    key = jax.random.PRNGKey(0)
    kp, kx, kb, kx2, kb2 = jax.random.split(key, 5)
    params = init_params(kp, hyper_input_dim, hyper_hidden_dim,
                         hyper_output_dim, sigma=0.5)

    # --- 1) eval, f32 I/O, f32 MXU (bit-parity path, tight tolerance) --------
    batch = 8
    prev_x = jax.random.normal(kx, (batch, hyper_output_dim), jnp.float32)
    B = jax.random.normal(kb, (batch, hyper_input_dim), jnp.float32)
    out = jax.block_until_ready(
        feature_selector_forward(prev_x, B, params, training=False,
                                 mxu_dtype=jnp.float32))
    ref = _reference_forward(prev_x, B, params, training=False)
    assert jnp.allclose(out, ref, atol=1e-5, rtol=1e-5), "eval(f32) mismatch"

    # --- 2) train, f32 I/O, default bf16 MXU, larger batch (grid may be > 1) -
    batch2 = 64
    prev_x2 = jax.random.normal(kx2, (batch2, hyper_output_dim), jnp.float32)
    B2 = jax.random.normal(kb2, (batch2, hyper_input_dim), jnp.float32)
    fresh_noise = jax.random.normal(jax.random.PRNGKey(7),
                                    (hyper_output_dim,), jnp.float32)
    out2 = jax.block_until_ready(
        feature_selector_forward(prev_x2, B2, params, training=True,
                                 noise=fresh_noise))
    ref2 = _reference_forward(prev_x2, B2, params, training=True,
                              noise=fresh_noise)
    assert jnp.allclose(out2, ref2, atol=5e-2, rtol=5e-2), \
        "train(bf16 MXU) mismatch"

    # --- 3) eval, bf16 I/O (exercises the bf16-native elementwise tail) ------
    prev_x3 = prev_x2.astype(jnp.bfloat16)
    B3 = B2.astype(jnp.bfloat16)
    out3 = jax.block_until_ready(
        feature_selector_forward(prev_x3, B3, params, training=False))
    ref3 = _reference_forward(prev_x3.astype(jnp.float32),
                              B3.astype(jnp.float32), params, training=False)
    assert jnp.allclose(out3.astype(jnp.float32), ref3, atol=1e-1, rtol=1e-1), \
        "eval(bf16 I/O) mismatch"

    print("KERNEL_OK")
</pallas_src>

<mosaic_0001>
module attributes {stable_mosaic.version = 11 : i64} {
  func.func @_fs_kernel_eval(%arg0: i32, %arg1: memref<8x32xf32, #tpu.memory_space<vmem>>, %arg2: memref<8x128xf32, #tpu.memory_space<vmem>>, %arg3: memref<32x128xf32, #tpu.memory_space<vmem>>, %arg4: memref<1x128xf32, #tpu.memory_space<vmem>>, %arg5: memref<128x128xf32, #tpu.memory_space<vmem>>, %arg6: memref<1x128xf32, #tpu.memory_space<vmem>>, %arg7: memref<8x128xf32, #tpu.memory_space<vmem>>) attributes {dimension_semantics = [#tpu.dimension_semantics<parallel>], iteration_bounds = array<i64: 1>, scalar_prefetch = 0 : i64, scratch_operands = 0 : i64, tpu.core_type = #tpu.core_type<tc>, window_params = [{transform_indices = @transform_0, window_bounds = array<i64: 8, 32>}, {transform_indices = @transform_1, window_bounds = array<i64: 8, 128>}, {pipeline_mode = #tpu.pipeline_mode<synchronous>, transform_indices = @transform_2, window_bounds = array<i64: 32, 128>}, {pipeline_mode = #tpu.pipeline_mode<synchronous>, transform_indices = @transform_3, window_bounds = array<i64: 1, 128>}, {pipeline_mode = #tpu.pipeline_mode<synchronous>, transform_indices = @transform_4, window_bounds = array<i64: 128, 128>}, {pipeline_mode = #tpu.pipeline_mode<synchronous>, transform_indices = @transform_5, window_bounds = array<i64: 1, 128>}, {transform_indices = @transform_6, window_bounds = array<i64: 8, 128>}]} {
    %c0 = arith.constant 0 : index
    %c0_0 = arith.constant 0 : index
    %0 = vector.load %arg1[%c0, %c0_0] : memref<8x32xf32, #tpu.memory_space<vmem>>, vector<8x32xf32>
    %c0_1 = arith.constant 0 : index
    %c0_2 = arith.constant 0 : index
    %1 = vector.load %arg3[%c0_1, %c0_2] : memref<32x128xf32, #tpu.memory_space<vmem>>, vector<32x128xf32>
    %cst = arith.constant dense<0.000000e+00> : vector<8x128xf32>
    %2 = tpu.matmul %0, %1, %cst {dimension_numbers = #tpu.dot_dimension_numbers<[1], [0], [0], [1], [0, 0, 1, 1], [], []>} : vector<8x32xf32>, vector<32x128xf32>, vector<8x128xf32> -> vector<8x128xf32>
    %c0_3 = arith.constant 0 : index
    %c0_4 = arith.constant 0 : index
    %3 = vector.load %arg4[%c0_3, %c0_4] : memref<1x128xf32, #tpu.memory_space<vmem>>, vector<1x128xf32>
    %4 = vector.broadcast %3 : vector<1x128xf32> to vector<8x128xf32>
    %5 = arith.addf %2, %4 : vector<8x128xf32>
    %cst_5 = arith.constant 0.000000e+00 : f32
    %6 = vector.broadcast %cst_5 : f32 to vector<8x128xf32>
    %7 = arith.maximumf %5, %6 : vector<8x128xf32>
    %c0_6 = arith.constant 0 : index
    %c0_7 = arith.constant 0 : index
    %8 = vector.load %arg5[%c0_6, %c0_7] : memref<128x128xf32, #tpu.memory_space<vmem>>, vector<128x128xf32>
    %cst_8 = arith.constant dense<0.000000e+00> : vector<8x128xf32>
    %9 = tpu.matmul %7, %8, %cst_8 {dimension_numbers = #tpu.dot_dimension_numbers<[1], [0], [0], [1], [0, 0, 1, 1], [], []>} : vector<8x128xf32>, vector<128x128xf32>, vector<8x128xf32> -> vector<8x128xf32>
    %c0_9 = arith.constant 0 : index
    %c0_10 = arith.constant 0 : index
    %10 = vector.load %arg6[%c0_9, %c0_10] : memref<1x128xf32, #tpu.memory_space<vmem>>, vector<1x128xf32>
    %11 = vector.broadcast %10 : vector<1x128xf32> to vector<8x128xf32>
    %12 = arith.addf %9, %11 : vector<8x128xf32>
    %13 = arith.negf %12 : vector<8x128xf32>
    %14 = math.exp %13 : vector<8x128xf32>
    %cst_11 = arith.constant 1.000000e+00 : f32
    %15 = vector.broadcast %cst_11 : f32 to vector<8x128xf32>
    %16 = arith.addf %15, %14 : vector<8x128xf32>
    %17 = arith.divf %15, %16 : vector<8x128xf32>
    %c0_12 = arith.constant 0 : index
    %c0_13 = arith.constant 0 : index
    %18 = vector.load %arg2[%c0_12, %c0_13] : memref<8x128xf32, #tpu.memory_space<vmem>>, vector<8x128xf32>
    %19 = arith.mulf %18, %17 : vector<8x128xf32>
    %c0_14 = arith.constant 0 : index
    %c0_15 = arith.constant 0 : index
    %20 = vector.load %arg7[%c0_14, %c0_15] : memref<8x128xf32, #tpu.memory_space<vmem>>, vector<8x128xf32>
    tpu.vector_store %arg7[%c0_14, %c0_15], %19 {strides = array<i32>} : memref<8x128xf32, #tpu.memory_space<vmem>>, vector<8x128xf32>,
    return
  }
  func.func @transform_0(%arg0: i32) -> (i32, i32) {
    %c0_i32 = arith.constant 0 : i32
    %c0_i32_0 = arith.constant 0 : i32
    return %arg0, %c0_i32 : i32, i32
  }
  func.func @transform_1(%arg0: i32) -> (i32, i32) {
    %c0_i32 = arith.constant 0 : i32
    %c0_i32_0 = arith.constant 0 : i32
    return %arg0, %c0_i32 : i32, i32
  }
  func.func @transform_2(%arg0: i32) -> (i32, i32) {
    %c0_i32 = arith.constant 0 : i32
    %c0_i32_0 = arith.constant 0 : i32
    %c0_i32_1 = arith.constant 0 : i32
    return %c0_i32, %c0_i32_0 : i32, i32
  }
  func.func @transform_3(%arg0: i32) -> (i32, i32) {
    %c0_i32 = arith.constant 0 : i32
    %c0_i32_0 = arith.constant 0 : i32
    %c0_i32_1 = arith.constant 0 : i32
    return %c0_i32, %c0_i32_0 : i32, i32
  }
  func.func @transform_4(%arg0: i32) -> (i32, i32) {
    %c0_i32 = arith.constant 0 : i32
    %c0_i32_0 = arith.constant 0 : i32
    %c0_i32_1 = arith.constant 0 : i32
    return %c0_i32, %c0_i32_0 : i32, i32
  }
  func.func @transform_5(%arg0: i32) -> (i32, i32) {
    %c0_i32 = arith.constant 0 : i32
    %c0_i32_0 = arith.constant 0 : i32
    %c0_i32_1 = arith.constant 0 : i32
    return %c0_i32, %c0_i32_0 : i32, i32
  }
  func.func @transform_6(%arg0: i32) -> (i32, i32) {
    %c0_i32 = arith.constant 0 : i32
    %c0_i32_0 = arith.constant 0 : i32
    return %arg0, %c0_i32 : i32, i32
  }
}

</mosaic_0001>

<llo_original>
// kernel: tpu_custom_call.1
$region0: #{tpu_custom_call.1}
  #allocation0 [shape = 'u32[]', space=smem, size = 0x4, offset = 0x4, fixed_abs, tag = 'smem constant byte address 0x4 - core index']
  #allocation1 [shape = 'u32[72,128]{1,0:T(1,128)}', space=vmem, size = 0x9000, scoped, tag = 'internal scratch']
  %s0 = inlined_call_operand.hbm [shape: f32[8,32], index: 0, kind: input, shape index: {}]
  %s1 = inlined_call_operand.hbm [shape: f32[8,128], index: 1, kind: input, shape index: {}]
  %s2 = inlined_call_operand.hbm [shape: f32[32,128], index: 2, kind: input, shape index: {}]
  %s3 = inlined_call_operand.vmem [shape: f32[1,128], index: 3, kind: input, shape index: {}]
  %s4 = inlined_call_operand.hbm [shape: f32[128,128], index: 4, kind: input, shape index: {}]
  %s5 = inlined_call_operand.vmem [shape: f32[1,128], index: 5, kind: input, shape index: {}]
  %s6 = inlined_call_operand.hbm [shape: f32[8,128], index: 6, kind: output, shape index: {}]
  %s7 = sld [smem:[#allocation0]]
  $region50: #{tpu_custom_call.1} parent=0
    _
  %s9 = ssub.s32 1, %s7
  %s10 = scalar_select 0, %s9, %s7
  $region1: #{tpu_custom_call.1} parent=0
    #allocation2 [shape = 'u8[4096]{0}', space=vmem, size = 0x1000, scoped, tag = 'input window, operand 0, single buffered']
    #allocation3 [shape = 's32[1]{0}', space=sflag, size = 0x4, scoped, tag = 'scoped memory for tpu_custom_call.1']
    #allocation4 [shape = 's32[1]{0}', space=sflag, size = 0x4, scoped, tag = 'scoped memory for tpu_custom_call.1']
    #allocation5 [shape = 'u8[4096]{0}', space=vmem, size = 0x1000, scoped, tag = 'input window, operand 1, single buffered']
    #allocation6 [shape = 's32[1]{0}', space=sflag, size = 0x4, scoped, tag = 'scoped memory for tpu_custom_call.1']
    #allocation7 [shape = 'u8[16384]{0}', space=vmem, size = 0x4000, scoped, tag = 'input window, operand 2, single buffered']
    #allocation8 [shape = 'u8[65536]{0}', space=vmem, size = 0x10000, scoped, tag = 'input window, operand 4, single buffered']
    #allocation9 [shape = 's32[1]{0}', space=sflag, size = 0x4, scoped, tag = 'scoped memory for tpu_custom_call.1']
    #allocation10 [shape = 'u8[4096]{0}', space=vmem, size = 0x1000, scoped, tag = 'output window, operand 0, single buffered']
    %11 = vsyncpa [#allocation3], 0
    %12 = vsyncpa [#allocation6], 0
    %13 = vsyncpa [#allocation9], 0
    %14 = vsyncpa [#allocation4], 0
    // Predicated region
    $region2: #{tpu_custom_call.1} parent=1 // pred_check
      _
    $region3: #{tpu_custom_call.1} parent=1 // pred_check_branch
      %16 = sbr.rel (0) target = $region5
    $region4: #{tpu_custom_call.1} parent=1 // pred_region
      %18 = vsyncadd [#allocation3], 0
      %s20 = sshll.u32 %s0, 4
      %s21 = int_to_ptr.hbm [resolvable:$true] %s20
      %s22 = sshll.u32 [#allocation2], 4
      %s23 = int_to_ptr.vmem [resolvable:$true] %s22
      %25 = dma.hbm_to_vmem [thread:$0]  %s21, 128, %s23, [#allocation3]
    $region5: #{tpu_custom_call.1} parent=1 // pred_fallthru
      _
    // Predicated region
    $region6: #{tpu_custom_call.1} parent=1 // pred_check
      _
    $region7: #{tpu_custom_call.1} parent=1 // pred_check_branch
      %27 = sbr.rel (0) target = $region9
    $region8: #{tpu_custom_call.1} parent=1 // pred_region
      %29 = vsyncadd [#allocation6], 0
      %s31 = sshll.u32 %s1, 4
      %s32 = int_to_ptr.hbm [resolvable:$true] %s31
      %s33 = sshll.u32 [#allocation5], 4
      %s34 = int_to_ptr.vmem [resolvable:$true] %s33
      %36 = dma.hbm_to_vmem [thread:$0]  %s32, 128, %s34, [#allocation6]
    $region9: #{tpu_custom_call.1} parent=1 // pred_fallthru
      _
    // Predicated region
    $region10: #{tpu_custom_call.1} parent=1 // pred_check
      _
    $region11: #{tpu_custom_call.1} parent=1 // pred_check_branch
      %38 = sbr.rel (0) target = $region13
    $region12: #{tpu_custom_call.1} parent=1 // pred_region
      %40 = vsyncadd [#allocation6], 0
      %s41 = sshll.u32 %s2, 4
      %s42 = int_to_ptr.hbm [resolvable:$true] %s41
      %s43 = sshll.u32 [#allocation7], 4
      %s44 = int_to_ptr.vmem [resolvable:$true] %s43
      %49 = dma.hbm_to_vmem [thread:$0]  %s42, 512, %s44, [#allocation6], 128, 128, 8
    $region13: #{tpu_custom_call.1} parent=1 // pred_fallthru
      _
    // Predicated region
    $region14: #{tpu_custom_call.1} parent=1 // pred_check
      _
    $region15: #{tpu_custom_call.1} parent=1 // pred_check_branch
      %51 = sbr.rel (0) target = $region17
    $region16: #{tpu_custom_call.1} parent=1 // pred_region
      _
    $region17: #{tpu_custom_call.1} parent=1 // pred_fallthru
      _
    // Predicated region
    $region18: #{tpu_custom_call.1} parent=1 // pred_check
      _
    $region19: #{tpu_custom_call.1} parent=1 // pred_check_branch
      %53 = sbr.rel (0) target = $region21
    $region20: #{tpu_custom_call.1} parent=1 // pred_region
      %55 = vsyncadd [#allocation9], 0
      %s56 = sshll.u32 %s4, 4
      %s57 = int_to_ptr.hbm [resolvable:$true] %s56
      %s58 = sshll.u32 [#allocation8], 4
      %s59 = int_to_ptr.vmem [resolvable:$true] %s58
      %64 = dma.hbm_to_vmem [thread:$0]  %s57, 2048, %s59, [#allocation9], 128, 128, 8
    $region21: #{tpu_custom_call.1} parent=1 // pred_fallthru
      _
    // Predicated region
    $region22: #{tpu_custom_call.1} parent=1 // pred_check
      _
    $region23: #{tpu_custom_call.1} parent=1 // pred_check_branch
      %66 = sbr.rel (0) target = $region25
    $region24: #{tpu_custom_call.1} parent=1 // pred_region
      _
    $region25: #{tpu_custom_call.1} parent=1 // pred_fallthru
      _
    // Predicated region
    $region26: #{tpu_custom_call.1} parent=1 // pred_check
      _
    $region27: #{tpu_custom_call.1} parent=1 // pred_check_branch
      %68 = sbr.rel (0) target = $region29
    $region28: #{tpu_custom_call.1} parent=1 // pred_region
      %70 = dma.done [#allocation3], 128
    $region29: #{tpu_custom_call.1} parent=1 // pred_fallthru
      _
    // Predicated region
    $region30: #{tpu_custom_call.1} parent=1 // pred_check
      _
    $region31: #{tpu_custom_call.1} parent=1 // pred_check_branch
      %72 = sbr.rel (0) target = $region33
    $region32: #{tpu_custom_call.1} parent=1 // pred_region
      %74 = dma.done [#allocation6], 128
    $region33: #{tpu_custom_call.1} parent=1 // pred_fallthru
      _
    // Predicated region
    $region34: #{tpu_custom_call.1} parent=1 // pred_check
      _
    $region35: #{tpu_custom_call.1} parent=1 // pred_check_branch
      %76 = sbr.rel (0) target = $region37
    $region36: #{tpu_custom_call.1} parent=1 // pred_region
      %78 = dma.done [#allocation6], 512
    $region37: #{tpu_custom_call.1} parent=1 // pred_fallthru
      _
    // Predicated region
    $region38: #{tpu_custom_call.1} parent=1 // pred_check
      _
    $region39: #{tpu_custom_call.1} parent=1 // pred_check_branch
      %80 = sbr.rel (0) target = $region41
    $region40: #{tpu_custom_call.1} parent=1 // pred_region
      %82 = dma.done [#allocation9], 2048
    $region41: #{tpu_custom_call.1} parent=1 // pred_fallthru
      _
    %v83 = vld [vmem:[#allocation2] sm:$0xff]
    %v84 = vld [vmem:[#allocation7] sm:$0xff]
    %v85 = vld [vmem:[#allocation7 + $0x8] sm:$0xff]
    %v86 = vld [vmem:[#allocation7 + $0x10] sm:$0xff]
    %v87 = vld [vmem:[#allocation7 + $0x18] sm:$0xff]
    %v88 = vld [vmem:[%s3] sm:$0x1]
    %v90 = vperm.slane %v88, 0
    %vm92 = vcmask 261120
    %v94 = vsel %vm92, %v83, 0
    %96 = vmatpush.msra.mxu0 0.0
    %97 = vmatpush.msra.mxu0 0.0
    %98 = vmatpush.msra.mxu0 0.0
    %99 = vmatpush.msra.mxu0 0.0
    %100 = vmatpush.msra.mxu0 0.0
    %101 = vmatpush.msra.mxu0 0.0
    %102 = vmatpush.msra.mxu0 0.0
    %103 = vmatpush.msra.mxu0 0.0
    %104 = vmatpush.msra.mxu0 0.0
    %105 = vmatpush.msra.mxu0 0.0
    %106 = vmatpush.msra.mxu0 0.0
    %107 = vmatpush.msra.mxu0 0.0
    %108 = vmatpush.msra.mxu0 %v87
    %109 = vmatpush.msra.mxu0 %v86
    %110 = vmatpush.msra.mxu0 %v85
    %111 = vmatpush.msra.mxu0 %v84
    %112 = vmatmul.f32.gmra.mxu0 %v94
    %v113 = vpop.f32.mrf.mxu0
    %v114 = vadd.f32 %v90, %v113
    %115 = vdwg.mxu0
    %v116 = vmax.f32 %v114, 0.0
    %v117 = vld [vmem:[#allocation8] sm:$0xff]
    %v118 = vld [vmem:[#allocation8 + $0x8] sm:$0xff]
    %v119 = vld [vmem:[#allocation8 + $0x10] sm:$0xff]
    %v120 = vld [vmem:[#allocation8 + $0x18] sm:$0xff]
    %v121 = vld [vmem:[#allocation8 + $0x20] sm:$0xff]
    %v122 = vld [vmem:[#allocation8 + $0x28] sm:$0xff]
    %v123 = vld [vmem:[#allocation8 + $0x30] sm:$0xff]
    %v124 = vld [vmem:[#allocation8 + $0x38] sm:$0xff]
    %v125 = vld [vmem:[#allocation8 + $0x40] sm:$0xff]
    %v126 = vld [vmem:[#allocation8 + $0x48] sm:$0xff]
    %v127 = vld [vmem:[#allocation8 + $0x50] sm:$0xff]
    %v128 = vld [vmem:[#allocation8 + $0x58] sm:$0xff]
    %v129 = vld [vmem:[#allocation8 + $0x60] sm:$0xff]
    %v130 = vld [vmem:[#allocation8 + $0x68] sm:$0xff]
    %v131 = vld [vmem:[#allocation8 + $0x70] sm:$0xff]
    %v132 = vld [vmem:[#allocation8 + $0x78] sm:$0xff]
    %v133 = vld [vmem:[%s5] sm:$0x1]
    %v135 = vperm.slane %v133, 0
    %137 = vmatpush.msra.mxu0 %v132
    %138 = vmatpush.msra.mxu0 %v131
    %139 = vmatpush.msra.mxu0 %v130
    %140 = vmatpush.msra.mxu0 %v129
    %141 = vmatpush.msra.mxu0 %v128
    %142 = vmatpush.msra.mxu0 %v127
    %143 = vmatpush.msra.mxu0 %v126
    %144 = vmatpush.msra.mxu0 %v125
    %145 = vmatpush.msra.mxu0 %v124
    %146 = vmatpush.msra.mxu0 %v123
    %147 = vmatpush.msra.mxu0 %v122
    %148 = vmatpush.msra.mxu0 %v121
    %149 = vmatpush.msra.mxu0 %v120
    %150 = vmatpush.msra.mxu0 %v119
    %151 = vmatpush.msra.mxu0 %v118
    %152 = vmatpush.msra.mxu0 %v117
    %153 = vmatmul.f32.gmra.mxu0 %v116
    %v154 = vpop.f32.mrf.mxu0
    %v155 = vadd.f32 %v135, %v154
    %156 = vdwg.mxu0
    %v157 = vxor.u32 %v155, 2147483648
    %v158 = vmul.f32 %v157, 1.442695
    %v159 = vpow.pop %v158
    %v160 = vadd.f32 %v159, 1.0
    %v161 = vrcp.pop %v160
    %v162 = vmul.f32 %v160, %v161
    %v163 = vsub.f32 1.0, %v162
    %v164 = vmul.f32 %v161, %v163
    %v165 = vadd.f32 %v161, %v164
    %vm166 = vweird.f32 %v160
    %vm167 = vweird.f32 %v161
    %vm168 = vmor %vm166, %vm167
    %v169 = vsel %vm168, %v161, %v165
    %v170 = vand.u32 2147483647, %v160
    %vm171 = vcmp.eq.f32.partialorder %v170, 8.507059e+37
    %v172 = vand.u32 %v160, 2147483648
    %v173 = vor.u32 1.1754944e-38, %v172
    %v174 = vsel %vm171, %v173, %v169
    %v175 = vmul.f32 1.0, %v174
    %v176 = vld [vmem:[#allocation5] sm:$0xff]
    %v177 = vmul.f32 %v176, %v175
    %178 = vst [vmem:[#allocation10] sm:$0xff] %v177
    // Predicated region
    $region42: #{tpu_custom_call.1} parent=1 // pred_check
      _
    $region43: #{tpu_custom_call.1} parent=1 // pred_check_branch
      %180 = sbr.rel (0) target = $region45
    $region44: #{tpu_custom_call.1} parent=1 // pred_region
      %182 = vsyncadd [#allocation4], 0
      %s184 = sshll.u32 [#allocation10], 4
      %s185 = int_to_ptr.vmem [resolvable:$true] %s184
      %s186 = sshll.u32 %s6, 4
      %s187 = int_to_ptr.hbm [resolvable:$true] %s186
      %189 = dma.vmem_to_hbm [thread:$0]  %s185, 128, %s187, [#allocation4]
    $region45: #{tpu_custom_call.1} parent=1 // pred_fallthru
      _
    // Predicated region
    $region46: #{tpu_custom_call.1} parent=1 // pred_check
      _
    $region47: #{tpu_custom_call.1} parent=1 // pred_check_branch
      %191 = sbr.rel (0) target = $region49
    $region48: #{tpu_custom_call.1} parent=1 // pred_region
      %193 = dma.done [#allocation4], 128
    $region49: #{tpu_custom_call.1} parent=1 // pred_fallthru
      _
    %194 = vsyncpa [#allocation3], 1
    %195 = vsyncpa [#allocation6], 1
    %196 = vsyncpa [#allocation9], 1
    %197 = vsyncpa [#allocation4], 1

</llo_original>
